<compile_context>
chip_gen: v6e
topology: v6e:2x2x1
jax: 0.10.0
libtpu: 0.0.40
codegen_flags: <defaults>
</compile_context>

<pallas_src>
import functools

import jax
import jax.numpy as jnp
from jax import lax
from jax.experimental import pallas as pl
from jax.experimental.pallas import tpu as pltpu


def _round_down(v, m):
    return (v // m) * m


def _cdiv(a, b):
    return (a + b - 1) // b


def _tversky_kernel(x_ref, t_ref, o_ref, *acc_refs, alpha, beta, eps,
                    nc_total, n_per_pixel, group, one_hot_fast, mask_rows):
    # program_id(0) = lane (spatial) tile, "parallel"
    # program_id(1) = row (N*C) tile, "arbitrary" reduction
    i = pl.program_id(1)
    rows, _lanes = x_ref.shape          # static block shape (tr, tl)

    if one_hot_fast:
        sxt_acc, sx_acc = acc_refs
        st_acc = None
    else:
        sxt_acc, sx_acc, st_acc = acc_refs

    @pl.when(i == 0)
    def _():
        sxt_acc[...] = jnp.zeros_like(sxt_acc)
        sx_acc[...] = jnp.zeros_like(sx_acc)
        if st_acc is not None:
            st_acc[...] = jnp.zeros_like(st_acc)

    ngroups = rows // group             # exact by construction in the wrapper

    def load_group(g):
        if ngroups == 1:
            xg = x_ref[...].astype(jnp.float32)
            tg = t_ref[...].astype(jnp.float32)
        else:
            start = pl.multiple_of(g * group, group)
            xg = x_ref[pl.ds(start, group), :].astype(jnp.float32)
            tg = t_ref[pl.ds(start, group), :].astype(jnp.float32)
        if mask_rows:
            # Zero rows past the true N*C extent (ragged last row tile).
            row_ids = lax.broadcasted_iota(jnp.int32, (xg.shape[0], 1), 0)
            keep = row_ids < (nc_total - i * rows - g * group)
            xg = jnp.where(keep, xg, 0.0)
            tg = jnp.where(keep, tg, 0.0)
        return xg, tg

    def accumulate(xg, tg):
        gh, lanes = xg.shape
        if gh % 8 == 0 and gh > 8:
            # Group of several sublane rows: reduce to (8, tl) in values
            # (sublane-major split, layout preserving), touch accs once.
            xgrp = xg.reshape(gh // 8, 8, lanes)
            tgrp = tg.reshape(gh // 8, 8, lanes)
            sxt_acc[...] += jnp.sum(xgrp * tgrp, axis=0)
            sx_acc[...] += jnp.sum(xgrp, axis=0)
            if st_acc is not None:
                st_acc[...] += jnp.sum(tgrp, axis=0)
        elif gh == 8:
            sxt_acc[...] += xg * tg
            sx_acc[...] += xg
            if st_acc is not None:
                st_acc[...] += tg
        else:
            # gh < 8: whole N*C axis is smaller than one sublane group.
            sxt_acc[0:1, :] += jnp.sum(xg * tg, axis=0, keepdims=True)
            sx_acc[0:1, :] += jnp.sum(xg, axis=0, keepdims=True)
            if st_acc is not None:
                st_acc[0:1, :] += jnp.sum(tg, axis=0, keepdims=True)

    if ngroups == 1:
        xg, tg = load_group(0)
        accumulate(xg, tg)
    else:
        @pl.loop(0, ngroups)
        def _(g):
            xg, tg = load_group(g)
            accumulate(xg, tg)

    @pl.when(i == pl.num_programs(1) - 1)
    def _():
        # Collapse the 8 sublanes once per lane tile (single XLU pass).
        sxt = jnp.sum(sxt_acc[...], axis=0, keepdims=True)   # sum(x*t), (1, tl)
        sx = jnp.sum(sx_acc[...], axis=0, keepdims=True)     # sum(x)
        inter = sxt
        fps = sx - sxt                                       # sum(x * (1 - t))
        if one_hot_fast:
            fns = n_per_pixel - sxt                          # sum(t) == N for one-hot
        else:
            st = jnp.sum(st_acc[...], axis=0, keepdims=True)
            fns = st - sxt                                   # sum((1 - x) * t)
        denom = inter + alpha * fps + beta * fns + eps
        o_ref[...] = 1.0 - inter / denom                     # lane-dense (1, tl)


def tversky_loss_pallas(inp, target, alpha: float, beta: float,
                        eps: float = 1e-6, *, target_is_one_hot: bool = False,
                        stream_input_bf16: bool = False):
    """inp, target: (N, C, H, W) arrays (target e.g. one-hot; any float dtype)."""
    N, C, H, W = inp.shape
    assert target.shape == inp.shape, "target must match input shape (N,C,H,W)"
    NC, HW = N * C, H * W

    x2d = inp.reshape(NC, HW)
    t2d = target.reshape(NC, HW)
    if stream_input_bf16 and x2d.dtype != jnp.bfloat16:
        # Optional: halves HBM read traffic for the input (slight numerics change).
        x2d = x2d.astype(jnp.bfloat16)

    x_item = x2d.dtype.itemsize
    t_item = t2d.dtype.itemsize

    # ---- per-generation VMEM budget --------------------------------------
    try:
        vmem_cap = int(pltpu.get_tpu_info().vmem_capacity_bytes)
    except Exception:
        vmem_cap = 64 * 1024 * 1024
    # ~3/4 of physical VMEM (48 MiB on v7x, 96 MiB on v5e/v6e), floor 32 MiB.
    vmem_limit = int(min(max(vmem_cap * 3 // 4, 32 * 1024 * 1024),
                         100 * 1024 * 1024))

    # ---- lane (spatial, surviving) tile -----------------------------------
    TL_CAP = 8192                        # cap lane width; grow rows instead
    if HW < 128:
        tl = HW                          # full-dim lane block (allowed)
    else:
        tl_max = HW if HW % 128 == 0 else _round_down(HW, 128)
        tl = min(tl_max, TL_CAP)
        if tl_max >= 256:
            # Guarantee >= 2 lane tiles so the "parallel" axis can split
            # across both v7x TensorCores (harmless on 1-TC chips).
            tl = min(tl, max(128, _round_down(tl_max // 2, 128)))
    num_lane_tiles = _cdiv(HW, tl)

    # ---- row (N*C, reduction) tile from the true per-step footprint -------
    one_hot_fast = bool(target_is_one_hot)
    n_acc = 2 if one_hot_fast else 3
    acc_bytes = n_acc * 8 * tl * 4
    margin = 8 * 1024 * 1024             # transients, output buffers, internals
    per_step = min(16 * 1024 * 1024,
                   max(1 * 1024 * 1024, (vmem_limit - acc_bytes - margin) // 2))
    bytes_per_row = tl * (x_item + t_item)
    TR_CAP = 4096
    tr_budget = max(8, _round_down(per_step // bytes_per_row, 32))
    if NC >= 8:
        tr = max(8, min(tr_budget, _round_down(NC, 8), TR_CAP))
    else:
        tr = NC                          # block row extent == full array dim
    num_row_tiles = _cdiv(NC, tr)
    mask_rows = (NC % tr) != 0           # ragged last row tile -> mask in-kernel

    group = tr
    for g in (32, 16, 8):
        if tr % g == 0:
            group = g
            break

    kernel = functools.partial(
        _tversky_kernel, alpha=float(alpha), beta=float(beta), eps=float(eps),
        nc_total=NC, n_per_pixel=float(N), group=group,
        one_hot_fast=one_hot_fast, mask_rows=mask_rows)

    scratch = [pltpu.VMEM((8, tl), jnp.float32) for _ in range(n_acc)]

    out = pl.pallas_call(
        kernel,
        out_shape=jax.ShapeDtypeStruct((1, num_lane_tiles * tl), jnp.float32),
        grid_spec=pltpu.PrefetchScalarGridSpec(
            num_scalar_prefetch=0,
            grid=(num_lane_tiles, num_row_tiles),
            in_specs=[
                pl.BlockSpec((tr, tl), lambda j, i: (i, j)),
                pl.BlockSpec((tr, tl), lambda j, i: (i, j)),
            ],
            out_specs=pl.BlockSpec((1, tl), lambda j, i: (0, j)),
            scratch_shapes=scratch,
        ),
        compiler_params=pltpu.CompilerParams(
            dimension_semantics=("parallel", "arbitrary"),
            vmem_limit_bytes=vmem_limit,
        ),
    )(x2d, t2d)

    # Drop lanes past H*W (garbage from the ragged last lane tile), then the
    # tiny final mean stays in the JAX wrapper.
    return jnp.mean(out[0, :HW])


def tversky_loss_ref(inp, target, alpha, beta, eps=1e-6):
    x = inp.astype(jnp.float32)
    t = target.astype(jnp.float32)
    dims = (0, 1)
    inter = jnp.sum(x * t, dims)
    fps = jnp.sum(x * (1.0 - t), dims)
    fns = jnp.sum((1.0 - x) * t, dims)
    tversky = inter / (inter + alpha * fps + beta * fns + eps)
    return jnp.mean(1.0 - tversky)


if __name__ == "__main__":
    # Deterministic "module params" (TverskyLoss has no learnable weights).
    alpha, beta = 0.5, 0.5

    key = jax.random.PRNGKey(0)
    k_in, k_tgt, k_in2, k_tgt2 = jax.random.split(key, 4)

    # ---- primary test: aligned small shape --------------------------------
    N, C, H, W = 2, 4, 16, 16
    logits = jax.random.normal(k_in, (N, C, H, W), dtype=jnp.float32)
    inp = jax.nn.softmax(logits, axis=1)                        # class probs
    labels = jax.random.randint(k_tgt, (N, H, W), 0, C)
    target = jnp.transpose(jax.nn.one_hot(labels, C, dtype=jnp.bfloat16),
                           (0, 3, 1, 2))                        # (N, C, H, W)

    ref = tversky_loss_ref(inp, target, alpha, beta)

    loss = jax.block_until_ready(tversky_loss_pallas(inp, target, alpha, beta))
    assert jnp.allclose(loss, ref, rtol=1e-5, atol=1e-6), (loss, ref)

    loss_fast = jax.block_until_ready(
        tversky_loss_pallas(inp, target, alpha, beta, target_is_one_hot=True))
    assert jnp.allclose(loss_fast, ref, rtol=1e-5, atol=1e-6), (loss_fast, ref)

    # ---- ragged test: exercises in-kernel masking (no jnp.pad anywhere) ---
    N2, C2, H2, W2 = 2, 5, 10, 13
    logits2 = jax.random.normal(k_in2, (N2, C2, H2, W2), dtype=jnp.float32)
    inp2 = jax.nn.softmax(logits2, axis=1)
    labels2 = jax.random.randint(k_tgt2, (N2, H2, W2), 0, C2)
    target2 = jnp.transpose(jax.nn.one_hot(labels2, C2, dtype=jnp.bfloat16),
                            (0, 3, 1, 2))

    ref2 = tversky_loss_ref(inp2, target2, alpha, beta)
    loss2 = jax.block_until_ready(tversky_loss_pallas(inp2, target2, alpha, beta))
    assert jnp.allclose(loss2, ref2, rtol=1e-5, atol=1e-6), (loss2, ref2)

    print("KERNEL_OK")
</pallas_src>

<mosaic_0001>
module attributes {stable_mosaic.version = 11 : i64} {
  func.func @_tversky_kernel(%arg0: i32, %arg1: i32, %arg2: memref<8x128xf32, #tpu.memory_space<vmem>>, %arg3: memref<8x128xbf16, #tpu.memory_space<vmem>>, %arg4: memref<1x128xf32, #tpu.memory_space<vmem>>, %arg5: memref<8x128xf32, #tpu.memory_space<vmem>>, %arg6: memref<8x128xf32, #tpu.memory_space<vmem>>, %arg7: memref<8x128xf32, #tpu.memory_space<vmem>>) attributes {dimension_semantics = [#tpu.dimension_semantics<parallel>, #tpu.dimension_semantics<arbitrary>], iteration_bounds = array<i64: 2, 1>, scalar_prefetch = 0 : i64, scratch_operands = 3 : i64, tpu.core_type = #tpu.core_type<tc>, window_params = [{transform_indices = @transform_0, window_bounds = array<i64: 8, 128>}, {transform_indices = @transform_1, window_bounds = array<i64: 8, 128>}, {transform_indices = @transform_2, window_bounds = array<i64: 1, 128>}]} {
    %c0_i32 = arith.constant 0 : i32
    %0 = arith.cmpi eq, %arg1, %c0_i32 : i32
    %1 = arith.extui %0 : i1 to i32
    %c0_i32_0 = arith.constant 0 : i32
    %2 = arith.cmpi ne, %1, %c0_i32_0 : i32
    scf.if %2 {
      %cst = arith.constant 0.000000e+00 : f32
      %19 = vector.broadcast %cst : f32 to vector<8x128xf32>
      %c0_18 = arith.constant 0 : index
      %c0_19 = arith.constant 0 : index
      %20 = vector.load %arg5[%c0_18, %c0_19] : memref<8x128xf32, #tpu.memory_space<vmem>>, vector<8x128xf32>
      tpu.vector_store %arg5[%c0_18, %c0_19], %19 {strides = array<i32>} : memref<8x128xf32, #tpu.memory_space<vmem>>, vector<8x128xf32>,
      %cst_20 = arith.constant 0.000000e+00 : f32
      %21 = vector.broadcast %cst_20 : f32 to vector<8x128xf32>
      %c0_21 = arith.constant 0 : index
      %c0_22 = arith.constant 0 : index
      %22 = vector.load %arg6[%c0_21, %c0_22] : memref<8x128xf32, #tpu.memory_space<vmem>>, vector<8x128xf32>
      tpu.vector_store %arg6[%c0_21, %c0_22], %21 {strides = array<i32>} : memref<8x128xf32, #tpu.memory_space<vmem>>, vector<8x128xf32>,
      %cst_23 = arith.constant 0.000000e+00 : f32
      %23 = vector.broadcast %cst_23 : f32 to vector<8x128xf32>
      %c0_24 = arith.constant 0 : index
      %c0_25 = arith.constant 0 : index
      %24 = vector.load %arg7[%c0_24, %c0_25] : memref<8x128xf32, #tpu.memory_space<vmem>>, vector<8x128xf32>
      tpu.vector_store %arg7[%c0_24, %c0_25], %23 {strides = array<i32>} : memref<8x128xf32, #tpu.memory_space<vmem>>, vector<8x128xf32>,
    } else {
    }
    %c0 = arith.constant 0 : index
    %c0_1 = arith.constant 0 : index
    %3 = vector.load %arg2[%c0, %c0_1] : memref<8x128xf32, #tpu.memory_space<vmem>>, vector<8x128xf32>
    %c0_2 = arith.constant 0 : index
    %c0_3 = arith.constant 0 : index
    %4 = vector.load %arg3[%c0_2, %c0_3] : memref<8x128xbf16, #tpu.memory_space<vmem>>, vector<8x128xbf16>
    %5 = arith.extf %4 : vector<8x128xbf16> to vector<8x128xf32>
    %c0_4 = arith.constant 0 : index
    %c0_5 = arith.constant 0 : index
    %6 = vector.load %arg5[%c0_4, %c0_5] : memref<8x128xf32, #tpu.memory_space<vmem>>, vector<8x128xf32>
    %7 = arith.mulf %3, %5 : vector<8x128xf32>
    %8 = arith.addf %6, %7 : vector<8x128xf32>
    %c0_6 = arith.constant 0 : index
    %c0_7 = arith.constant 0 : index
    %9 = vector.load %arg5[%c0_6, %c0_7] : memref<8x128xf32, #tpu.memory_space<vmem>>, vector<8x128xf32>
    tpu.vector_store %arg5[%c0_6, %c0_7], %8 {strides = array<i32>} : memref<8x128xf32, #tpu.memory_space<vmem>>, vector<8x128xf32>,
    %c0_8 = arith.constant 0 : index
    %c0_9 = arith.constant 0 : index
    %10 = vector.load %arg6[%c0_8, %c0_9] : memref<8x128xf32, #tpu.memory_space<vmem>>, vector<8x128xf32>
    %11 = arith.addf %10, %3 : vector<8x128xf32>
    %c0_10 = arith.constant 0 : index
    %c0_11 = arith.constant 0 : index
    %12 = vector.load %arg6[%c0_10, %c0_11] : memref<8x128xf32, #tpu.memory_space<vmem>>, vector<8x128xf32>
    tpu.vector_store %arg6[%c0_10, %c0_11], %11 {strides = array<i32>} : memref<8x128xf32, #tpu.memory_space<vmem>>, vector<8x128xf32>,
    %c0_12 = arith.constant 0 : index
    %c0_13 = arith.constant 0 : index
    %13 = vector.load %arg7[%c0_12, %c0_13] : memref<8x128xf32, #tpu.memory_space<vmem>>, vector<8x128xf32>
    %14 = arith.addf %13, %5 : vector<8x128xf32>
    %c0_14 = arith.constant 0 : index
    %c0_15 = arith.constant 0 : index
    %15 = vector.load %arg7[%c0_14, %c0_15] : memref<8x128xf32, #tpu.memory_space<vmem>>, vector<8x128xf32>
    tpu.vector_store %arg7[%c0_14, %c0_15], %14 {strides = array<i32>} : memref<8x128xf32, #tpu.memory_space<vmem>>, vector<8x128xf32>,
    %c0_i32_16 = arith.constant 0 : i32
    %16 = arith.cmpi eq, %arg1, %c0_i32_16 : i32
    %17 = arith.extui %16 : i1 to i32
    %c0_i32_17 = arith.constant 0 : i32
    %18 = arith.cmpi ne, %17, %c0_i32_17 : i32
    scf.if %18 {
      %c0_18 = arith.constant 0 : index
      %c0_19 = arith.constant 0 : index
      %19 = vector.load %arg5[%c0_18, %c0_19] : memref<8x128xf32, #tpu.memory_space<vmem>>, vector<8x128xf32>
      %cst = arith.constant dense<0.000000e+00> : vector<128xf32>
      %20 = vector.multi_reduction <add>, %19, %cst [0] : vector<8x128xf32> to vector<128xf32>
      %21 = vector.shape_cast %20 : vector<128xf32> to vector<1x128xf32>
      %c0_20 = arith.constant 0 : index
      %c0_21 = arith.constant 0 : index
      %22 = vector.load %arg6[%c0_20, %c0_21] : memref<8x128xf32, #tpu.memory_space<vmem>>, vector<8x128xf32>
      %cst_22 = arith.constant dense<0.000000e+00> : vector<128xf32>
      %23 = vector.multi_reduction <add>, %22, %cst_22 [0] : vector<8x128xf32> to vector<128xf32>
      %24 = vector.shape_cast %23 : vector<128xf32> to vector<1x128xf32>
      %25 = arith.subf %24, %21 : vector<1x128xf32>
      %c0_23 = arith.constant 0 : index
      %c0_24 = arith.constant 0 : index
      %26 = vector.load %arg7[%c0_23, %c0_24] : memref<8x128xf32, #tpu.memory_space<vmem>>, vector<8x128xf32>
      %cst_25 = arith.constant dense<0.000000e+00> : vector<128xf32>
      %27 = vector.multi_reduction <add>, %26, %cst_25 [0] : vector<8x128xf32> to vector<128xf32>
      %28 = vector.shape_cast %27 : vector<128xf32> to vector<1x128xf32>
      %29 = arith.subf %28, %21 : vector<1x128xf32>
      %cst_26 = arith.constant 5.000000e-01 : f32
      %30 = vector.broadcast %cst_26 : f32 to vector<1x128xf32>
      %31 = arith.mulf %30, %25 : vector<1x128xf32>
      %32 = arith.addf %21, %31 : vector<1x128xf32>
      %cst_27 = arith.constant 5.000000e-01 : f32
      %33 = vector.broadcast %cst_27 : f32 to vector<1x128xf32>
      %34 = arith.mulf %33, %29 : vector<1x128xf32>
      %35 = arith.addf %32, %34 : vector<1x128xf32>
      %cst_28 = arith.constant 9.99999997E-7 : f32
      %36 = vector.broadcast %cst_28 : f32 to vector<1x128xf32>
      %37 = arith.addf %35, %36 : vector<1x128xf32>
      %38 = arith.divf %21, %37 : vector<1x128xf32>
      %cst_29 = arith.constant 1.000000e+00 : f32
      %39 = vector.broadcast %cst_29 : f32 to vector<1x128xf32>
      %40 = arith.subf %39, %38 : vector<1x128xf32>
      %c0_30 = arith.constant 0 : index
      %c0_31 = arith.constant 0 : index
      %41 = vector.load %arg4[%c0_30, %c0_31] : memref<1x128xf32, #tpu.memory_space<vmem>>, vector<1x128xf32>
      tpu.vector_store %arg4[%c0_30, %c0_31], %40 {strides = array<i32>} : memref<1x128xf32, #tpu.memory_space<vmem>>, vector<1x128xf32>,
    } else {
    }
    return
  }
  func.func @transform_0(%arg0: i32, %arg1: i32) -> (i32, i32) {
    %c0_i32 = arith.constant 0 : i32
    return %arg1, %arg0 : i32, i32
  }
  func.func @transform_1(%arg0: i32, %arg1: i32) -> (i32, i32) {
    %c0_i32 = arith.constant 0 : i32
    return %arg1, %arg0 : i32, i32
  }
  func.func @transform_2(%arg0: i32, %arg1: i32) -> (i32, i32) {
    %c0_i32 = arith.constant 0 : i32
    %c0_i32_0 = arith.constant 0 : i32
    return %c0_i32, %arg0 : i32, i32
  }
}

</mosaic_0001>

<llo_original>
// kernel: tpu_custom_call.1
$region0: #{tpu_custom_call.1}
  #allocation0 [shape = 'u32[]', space=smem, size = 0x4, offset = 0x4, fixed_abs, tag = 'smem constant byte address 0x4 - core index']
  #allocation1 [shape = 'u32[144,128]{1,0:T(1,128)}', space=vmem, size = 0x12000, scoped, tag = 'internal scratch']
  #allocation2 [shape = 'f32[8,128]{1,0:T(8,128)}', space=vmem, size = 0x1000, scoped, tag = 'scratch operand']
  #allocation3 [shape = 'f32[8,128]{1,0:T(8,128)}', space=vmem, size = 0x1000, scoped, tag = 'scratch operand']
  #allocation4 [shape = 'f32[8,128]{1,0:T(8,128)}', space=vmem, size = 0x1000, scoped, tag = 'scratch operand']
  %s0 = inlined_call_operand.hbm [shape: f32[8,256], index: 0, kind: input, shape index: {}]
  %s1 = inlined_call_operand.hbm [shape: bf16[8,256], index: 1, kind: input, shape index: {}]
  %s2 = inlined_call_operand.hbm [shape: f32[1,256], index: 2, kind: output, shape index: {}]
  %s3 = sld [smem:[#allocation0]]
  $region57: #{tpu_custom_call.1} parent=0
    _
  %s5 = ssub.s32 1, %s3
  %s6 = scalar_select 0, %s5, %s3
  $region1: #{tpu_custom_call.1} parent=0
    #allocation5 [shape = 'u8[8192]{0}', space=vmem, size = 0x2000, scoped, tag = 'input window, operand 0']
    #allocation6 [shape = 's32[2]{0}', space=sflag, size = 0x8, scoped, tag = 'scoped memory for tpu_custom_call.1']
    #allocation7 [shape = 's32[2]{0}', space=sflag, size = 0x8, scoped, tag = 'scoped memory for tpu_custom_call.1']
    #allocation8 [shape = 'u8[4096]{0}', space=vmem, size = 0x1000, scoped, tag = 'input window, operand 1']
    #allocation9 [shape = 's32[2]{0}', space=sflag, size = 0x8, scoped, tag = 'scoped memory for tpu_custom_call.1']
    #allocation10 [shape = 'u8[1024]{0}', space=vmem, size = 0x400, scoped, tag = 'output window, operand 0']
    %7 = vsyncpa [#allocation6], 0
    %s8 = scalar_lea.sflag [#allocation6], 1
    %9 = vsyncpa %s8, 0
    %10 = vsyncpa [#allocation9], 0
    %s11 = scalar_lea.sflag [#allocation9], 1
    %12 = vsyncpa %s11, 0
    %13 = vsyncpa [#allocation7], 0
    %s14 = scalar_lea.sflag [#allocation7], 1
    %15 = vsyncpa %s14, 0
    loop: start=0, step=1, limit=4
    $region2: #{tpu_custom_call.1} parent=1 // loop_pre_header
      _
    $region3: #{tpu_custom_call.1} parent=1 // loop_header
      %s17 = sphi 0, %s21
      %p18 = scmp.ge.s32.totalorder %s17, 4
      %s24 = sphi 0, %s36
      %s25 = sphi 0, %s32
      %s26 = sphi 0, %s24
      %s27 = sphi 0, %s25
      %s28 = sphi 0, %s26
      %s29 = sphi 0, %s27
      %s41 = sphi 0, %s43
      %s44 = sphi 0, %s41
      %s45 = sphi 0, %s44
      %s61 = sphi 0, %s45
      %s69 = sphi 0, %s71
      %s72 = sphi 0, %s69
      %s73 = sphi 0, %s72
      %s89 = sphi 0, %s73
      %s95 = sphi 0, %s97
      %s98 = sphi 0, %s95
      %s99 = sphi 0, %s98
      %s115 = sphi 0, %s99
    $region4: #{tpu_custom_call.1} parent=1 // loop_header_branch
      %20 = sbr.rel (%p18) target = $region8
    $region5: #{tpu_custom_call.1} parent=1 // loop_body
      %s22 = ssub.s32 %s17, 1
      %s23 = ssub.s32 %s17, 2
      %s30 = sadd.s32 1, %s25
      %p31 = scmp.ge.s32.totalorder %s30, 1
      %s32 = scalar_select %p31, 0, %s30
      %s33 = sadd.s32 1, %s24
      %s34 = scalar_select %p31, %s33, %s24
      %p35 = scmp.ge.s32.totalorder %s34, 2
      %s36 = scalar_select %p35, 0, %s34
      %s37 = ssub.s32 %s25, %s32
      %s38 = ssub.s32 %s24, %s36
      %s39 = sor.u32 %s37, %s38
      %p40 = scmp.eq.s32.totalorder %s39, 0
      %s42 = sadd.s32 %s41, 1
      %s43 = scalar_select %p40, %s41, %s42
      %p46 = pneg %p40
      %p47 = scmp.eq.s32.totalorder %s17, 1
      %p48 = por %p46, %p47
      %p49 = scmp.ne.s32.totalorder %s41, %s44
      %p50 = scmp.eq.s32.totalorder %s17, 0
      %p51 = por %p49, %p50
      %p52 = scmp.ne.s32.totalorder %s41, %s44
      %p53 = scmp.eq.s32.totalorder %s22, 1
      %p54 = por %p52, %p53
      %p55 = scmp.ne.s32.totalorder %s44, %s45
      %p56 = scmp.eq.s32.totalorder %s22, 0
      %p57 = por %p55, %p56
      %p58 = scmp.ne.s32.totalorder %s44, %s45
      %p59 = scmp.eq.s32.totalorder %s23, 1
      %p60 = por %p58, %p59
      %p62 = scmp.ne.s32.totalorder %s45, %s61
      %p63 = scmp.eq.s32.totalorder %s23, 0
      %p64 = por %p62, %p63
      %s65 = ssub.s32 %s25, %s32
      %s66 = ssub.s32 %s24, %s36
      %s67 = sor.u32 %s65, %s66
      %p68 = scmp.eq.s32.totalorder %s67, 0
      %s70 = sadd.s32 %s69, 1
      %s71 = scalar_select %p68, %s69, %s70
      %p74 = pneg %p68
      %p75 = scmp.eq.s32.totalorder %s17, 1
      %p76 = por %p74, %p75
      %p77 = scmp.ne.s32.totalorder %s69, %s72
      %p78 = scmp.eq.s32.totalorder %s17, 0
      %p79 = por %p77, %p78
      %p80 = scmp.ne.s32.totalorder %s69, %s72
      %p81 = scmp.eq.s32.totalorder %s22, 1
      %p82 = por %p80, %p81
      %p83 = scmp.ne.s32.totalorder %s72, %s73
      %p84 = scmp.eq.s32.totalorder %s22, 0
      %p85 = por %p83, %p84
      %p86 = scmp.ne.s32.totalorder %s72, %s73
      %p87 = scmp.eq.s32.totalorder %s23, 1
      %p88 = por %p86, %p87
      %p90 = scmp.ne.s32.totalorder %s73, %s89
      %p91 = scmp.eq.s32.totalorder %s23, 0
      %p92 = por %p90, %p91
      %s93 = ssub.s32 %s24, %s36
      %p94 = scmp.eq.s32.totalorder %s93, 0
      %s96 = sadd.s32 %s95, 1
      %s97 = scalar_select %p94, %s95, %s96
      %p100 = pneg %p94
      %p101 = scmp.eq.s32.totalorder %s17, 1
      %p102 = por %p100, %p101
      %p103 = scmp.ne.s32.totalorder %s95, %s98
      %p104 = scmp.eq.s32.totalorder %s17, 0
      %p105 = por %p103, %p104
      %p106 = scmp.ne.s32.totalorder %s95, %s98
      %p107 = scmp.eq.s32.totalorder %s22, 1
      %p108 = por %p106, %p107
      %p109 = scmp.ne.s32.totalorder %s98, %s99
      %p110 = scmp.eq.s32.totalorder %s22, 0
      %p111 = por %p109, %p110
      %p112 = scmp.ne.s32.totalorder %s98, %s99
      %p113 = scmp.eq.s32.totalorder %s23, 1
      %p114 = por %p112, %p113
      %p116 = scmp.ne.s32.totalorder %s99, %s115
      %p117 = scmp.eq.s32.totalorder %s23, 0
      %p118 = por %p116, %p117
      %p119 = scmp.le.s32.totalorder 1, %s17
      %p120 = scmp.lt.s32.totalorder %s17, 3
      %p121 = pnand %p119, %p120
      %p122 = pneg %p121
      // Predicated region
      $region9: #{tpu_custom_call.1} parent=5 // pred_check
        _
      $region10: #{tpu_custom_call.1} parent=5 // pred_check_branch
        %124 = sbr.rel (%p121) target = $region12
      $region11: #{tpu_custom_call.1} parent=5 // pred_region
        %s125 = ssub.s32 %s17, 1
      $region12: #{tpu_custom_call.1} parent=5 // pred_fallthru
        _
      %p126 = scmp.lt.s32.totalorder %s17, 2
      // Predicated region
      $region13: #{tpu_custom_call.1} parent=5 // pred_check
        %p127 = pneg %p126
      $region14: #{tpu_custom_call.1} parent=5 // pred_check_branch
        %129 = sbr.rel (%p127) target = $region16
      $region15: #{tpu_custom_call.1} parent=5 // pred_region
        // Predicated region
        $region17: #{tpu_custom_call.1} parent=15 // pred_check
          %p130 = pneg %p51
        $region18: #{tpu_custom_call.1} parent=15 // pred_check_branch
          %132 = sbr.rel (%p130) target = $region20
        $region19: #{tpu_custom_call.1} parent=15 // pred_region
          %s133 = sand.u32 %s41, 1
          %s134 = scalar_lea.sflag [#allocation6], %s133
          %s135 = sand.u32 %s41, 1
          %s136 = smul.addr %s135, 8
          %s137 = scalar_lea.vmem [#allocation5], %s136
          %s139 = ssub.s32 128, 128
          %140 = vsyncadd %s134, %s139
          %s141 = smul.addr %s25, 2
          %s142 = sadd.s32 %s24, %s141
          %s143 = smul.addr %s142, 128
          %s144 = scalar_lea.hbm %s0, %s143
          %s146 = sshll.u32 %s137, 4
          %s147 = int_to_ptr.vmem [resolvable:$true] %s146
          %149 = dma.hbm_to_vmem [thread:$0]  %s144, 128, %s147, %s134
        $region20: #{tpu_custom_call.1} parent=15 // pred_fallthru
          _
        // Predicated region
        $region21: #{tpu_custom_call.1} parent=15 // pred_check
          %p150 = pneg %p79
        $region22: #{tpu_custom_call.1} parent=15 // pred_check_branch
          %152 = sbr.rel (%p150) target = $region24
        $region23: #{tpu_custom_call.1} parent=15 // pred_region
          %s153 = sand.u32 %s69, 1
          %s154 = scalar_lea.sflag [#allocation9], %s153
          %s155 = sand.u32 %s69, 1
          %s156 = smul.addr %s155, 4
          %s157 = scalar_lea.vmem [#allocation8], %s156
          %s159 = ssub.s32 64, 64
          %160 = vsyncadd %s154, %s159
          %s161 = smul.addr %s25, 2
          %s162 = sadd.s32 %s24, %s161
          %s163 = smul.addr %s162, 64
          %s164 = scalar_lea.hbm %s1, %s163
          %s166 = sshll.u32 %s157, 4
          %s167 = int_to_ptr.vmem [resolvable:$true] %s166
          %169 = dma.hbm_to_vmem [thread:$0]  %s164, 64, %s167, %s154
        $region24: #{tpu_custom_call.1} parent=15 // pred_fallthru
          _
      $region16: #{tpu_custom_call.1} parent=5 // pred_fallthru
        _
      %p170 = scmp.le.s32.totalorder 1, %s17
      %p171 = scmp.lt.s32.totalorder %s17, 3
      %p172 = pnand %p170, %p171
      %p173 = pneg %p172
      // Predicated region
      $region25: #{tpu_custom_call.1} parent=5 // pred_check
        _
      $region26: #{tpu_custom_call.1} parent=5 // pred_check_branch
        %175 = sbr.rel (%p172) target = $region28
      $region27: #{tpu_custom_call.1} parent=5 // pred_region
        %s176 = ssub.s32 %s17, 1
        %s177 = sand.u32 %s44, 1
        %s178 = scalar_lea.sflag [#allocation6], %s177
        %s179 = sand.u32 %s44, 1
        %s180 = smul.addr %s179, 8
        %s181 = scalar_lea.vmem [#allocation5], %s180
        // Predicated region
        $region29: #{tpu_custom_call.1} parent=27 // pred_check
          %p182 = pneg %p57
        $region30: #{tpu_custom_call.1} parent=27 // pred_check_branch
          %184 = sbr.rel (%p182) target = $region32
        $region31: #{tpu_custom_call.1} parent=27 // pred_region
          %185 = dma.done %s178, 128
        $region32: #{tpu_custom_call.1} parent=27 // pred_fallthru
          _
        %s186 = sand.u32 %s72, 1
        %s187 = scalar_lea.sflag [#allocation9], %s186
        %s188 = sand.u32 %s72, 1
        %s189 = smul.addr %s188, 4
        %s190 = scalar_lea.vmem [#allocation8], %s189
        // Predicated region
        $region33: #{tpu_custom_call.1} parent=27 // pred_check
          %p191 = pneg %p85
        $region34: #{tpu_custom_call.1} parent=27 // pred_check_branch
          %193 = sbr.rel (%p191) target = $region36
        $region35: #{tpu_custom_call.1} parent=27 // pred_region
          %194 = dma.done %s187, 64
        $region36: #{tpu_custom_call.1} parent=27 // pred_fallthru
          _
        %s195 = sand.u32 %s44, 1
        %s196 = scalar_lea.sflag [#allocation6], %s195
        %s197 = sand.u32 %s44, 1
        %s198 = smul.addr %s197, 8
        %s199 = scalar_lea.vmem [#allocation5], %s198
        %p200 = pneg %p57
        %p201 = pneg %p54
        %s202 = sand.u32 %s72, 1
        %s203 = scalar_lea.sflag [#allocation9], %s202
        %s204 = sand.u32 %s72, 1
        %s205 = smul.addr %s204, 4
        %s206 = scalar_lea.vmem [#allocation8], %s205
        %p207 = pneg %p85
        %p208 = pneg %p82
        %p209 = pneg %p111
        %p210 = pneg %p108
        %s211 = sand.u32 %s98, 1
        %s212 = scalar_lea.sflag [#allocation7], %s211
        %s213 = sand.u32 %s98, 1
        %s214 = scalar_lea.vmem [#allocation10], %s213
        %p215 = scmp.eq.s32.totalorder %s27, 0
        // Predicated region
        $region37: #{tpu_custom_call.1} parent=27 // pred_check
          %p216 = pneg %p215
        $region38: #{tpu_custom_call.1} parent=27 // pred_check_branch
          %218 = sbr.rel (%p216) target = $region40
        $region39: #{tpu_custom_call.1} parent=27 // pred_region
          %219 = vst [vmem:[#allocation2] sm:$0xff] 0.0
          %220 = vst [vmem:[#allocation3] sm:$0xff] 0.0
          %221 = vst [vmem:[#allocation4] sm:$0xff] 0.0
        $region40: #{tpu_custom_call.1} parent=27 // pred_fallthru
          _
        %v222 = vld [vmem:[%s181] sm:$0xff]
        %v223 = vld [vmem:[%s190] sm:$0xf]
        %v224 = vunpack.c.l.bf16 %v223
        %v225 = vld [vmem:[#allocation2] sm:$0xff]
        %v226 = vmul.f32 %v222, %v224
        %v227 = vadd.f32 %v225, %v226
        %228 = vst [vmem:[#allocation2] sm:$0xff] %v227
        %v229 = vld [vmem:[#allocation3] sm:$0xff]
        %v230 = vadd.f32 %v229, %v222
        %231 = vst [vmem:[#allocation3] sm:$0xff] %v230
        %v232 = vld [vmem:[#allocation4] sm:$0xff]
        %v233 = vadd.f32 %v232, %v224
        %234 = vst [vmem:[#allocation4] sm:$0xff] %v233
        // Predicated region
        $region41: #{tpu_custom_call.1} parent=27 // pred_check
          %p235 = pneg %p215
        $region42: #{tpu_custom_call.1} parent=27 // pred_check_branch
          %237 = sbr.rel (%p235) target = $region44
        $region43: #{tpu_custom_call.1} parent=27 // pred_region
          %v238 = vld [vmem:[#allocation2] sm:$0xff]
          %v239 = vrot.slane %v238, 4
          %v240 = vadd.f32 %v238, %v239
          %v241 = vrot.slane %v240, 2
          %v242 = vadd.f32 %v240, %v241
          %v243 = vrot.slane %v242, 1
          %v244 = vadd.f32 %v242, %v243
          %v245 = vld [vmem:[#allocation3] sm:$0xff]
          %v246 = vrot.slane %v245, 4
          %v247 = vadd.f32 %v245, %v246
          %v248 = vrot.slane %v247, 2
          %v249 = vadd.f32 %v247, %v248
          %v250 = vrot.slane %v249, 1
          %v251 = vadd.f32 %v249, %v250
          %v252 = vsub.f32 %v251, %v244
          %v253 = vld [vmem:[#allocation4] sm:$0xff]
          %v254 = vrot.slane %v253, 4
          %v255 = vadd.f32 %v253, %v254
          %v256 = vrot.slane %v255, 2
          %v257 = vadd.f32 %v255, %v256
          %v258 = vrot.slane %v257, 1
          %v259 = vadd.f32 %v257, %v258
          %v260 = vsub.f32 %v259, %v244
          %v261 = vmul.f32 %v252, 0.5
          %v262 = vadd.f32 %v244, %v261
          %v263 = vmul.f32 %v260, 0.5
          %v264 = vadd.f32 %v262, %v263
          %v265 = vadd.f32 %v264, 1e-06
          %v266 = vrcp.pop %v265
          %v267 = vmul.f32 %v244, %v266
          %v268 = vsub.f32 1.0, %v267
          %269 = vst [vmem:[%s214] sm:$0x1] %v268
        $region44: #{tpu_custom_call.1} parent=27 // pred_fallthru
          _
        %s270 = sand.u32 %s98, 1
        %s271 = scalar_lea.sflag [#allocation7], %s270
        %s272 = sand.u32 %s98, 1
        %s273 = scalar_lea.vmem [#allocation10], %s272
        // Predicated region
        $region45: #{tpu_custom_call.1} parent=27 // pred_check
          %p274 = pneg %p108
        $region46: #{tpu_custom_call.1} parent=27 // pred_check_branch
          %276 = sbr.rel (%p274) target = $region48
        $region47: #{tpu_custom_call.1} parent=27 // pred_region
          %s278 = ssub.s32 16, 16
          %279 = vsyncadd %s271, %s278
          %s280 = smul.addr %s26, 16
          %s281 = scalar_lea.hbm %s2, %s280
          %s283 = sshll.u32 %s273, 4
          %s284 = int_to_ptr.vmem [resolvable:$true] %s283
          %286 = dma.vmem_to_hbm [thread:$0]  %s284, 16, %s281, %s271
        $region48: #{tpu_custom_call.1} parent=27 // pred_fallthru
          _
      $region28: #{tpu_custom_call.1} parent=5 // pred_fallthru
        _
      %p287 = scmp.le.s32.totalorder 2, %s17
      // Predicated region
      $region49: #{tpu_custom_call.1} parent=5 // pred_check
        %p288 = pneg %p287
      $region50: #{tpu_custom_call.1} parent=5 // pred_check_branch
        %290 = sbr.rel (%p288) target = $region52
      $region51: #{tpu_custom_call.1} parent=5 // pred_region
        %s291 = ssub.s32 %s17, 2
        // Predicated region
        $region53: #{tpu_custom_call.1} parent=51 // pred_check
          %p292 = pneg %p114
        $region54: #{tpu_custom_call.1} parent=51 // pred_check_branch
          %294 = sbr.rel (%p292) target = $region56
        $region55: #{tpu_custom_call.1} parent=51 // pred_region
          %s295 = sand.u32 %s99, 1
          %s296 = scalar_lea.sflag [#allocation7], %s295
          %s297 = sand.u32 %s99, 1
          %s298 = scalar_lea.vmem [#allocation10], %s297
          %299 = dma.done %s296, 16
        $region56: #{tpu_custom_call.1} parent=51 // pred_fallthru
          _
      $region52: #{tpu_custom_call.1} parent=5 // pred_fallthru
        _
    $region6: #{tpu_custom_call.1} parent=1 // loop_footer
      %s21 = sadd.s32 1, %s17
    $region7: #{tpu_custom_call.1} parent=1 // loop_footer_branch
      %16 = sbr.rel target = $region3
    $region8: #{tpu_custom_call.1} parent=1 // loop_exit
      _
    %300 = vsyncpa [#allocation6], 1
    %s301 = scalar_lea.sflag [#allocation6], 1
    %302 = vsyncpa %s301, 1
    %303 = vsyncpa [#allocation9], 1
    %s304 = scalar_lea.sflag [#allocation9], 1
    %305 = vsyncpa %s304, 1
    %306 = vsyncpa [#allocation7], 1
    %s307 = scalar_lea.sflag [#allocation7], 1
    %308 = vsyncpa %s307, 1

</llo_original>
